<compile_context>
chip_gen: v7x
topology: tpu7x:2x2x1
jax: 0.10.0
libtpu: 0.0.40
codegen_flags: <defaults>
</compile_context>

<pallas_src>
import functools

import jax
import jax.numpy as jnp
import numpy as np
from jax.experimental import pallas as pl
from jax.experimental.pallas import tpu as pltpu

MARGIN = 1.0   # nn.TripletMarginLoss default
EPS = 1e-6     # F.pairwise_distance default (added to the difference)

# Estimated number of live [ts, V] float32 temporaries inside the kernel
# (a/p/n casts, column iota, exp / where temporaries, pairwise differences).
_F32_TEMPS_PER_ROW = 8


def _vmem_budgets():
    """(vmem_limit_bytes, per-step working-set budget) per TPU generation."""
    try:
        cap = pltpu.get_tpu_info().vmem_capacity_bytes
    except Exception:
        cap = 64 * 1024 * 1024
    if cap >= 100 * 1024 * 1024:                      # v5e / v6e: 128 MiB VMEM
        return 96 * 1024 * 1024, 56 * 1024 * 1024
    return 48 * 1024 * 1024, 24 * 1024 * 1024         # v7x: 64 MiB per TC


def _choose_seq_tile(S, V, itemsize, budget, max_seq_tile=None):
    """Largest sequence tile (multiple of 8, or == S) whose double-buffered
    merged (3, ts, V) input block plus f32 temporaries fit in `budget`."""
    per_row = 3 * 2 * V * itemsize + _F32_TEMPS_PER_ROW * V * 4
    cap = max(8, budget // per_row)
    if max_seq_tile is not None:
        cap = max(8, min(cap, max_seq_tile))
    if S <= cap:
        return int(S)
    return int(max(8, (cap // 8) * 8))


def _fused_loss_kernel(logits_ref, labels_ref, ce_ref, tr_ref, *,
                       seq_len, needs_mask):
    si = pl.program_id(1)

    # Zero the per-triplet accumulators at the start of each triplet's
    # sequence sweep; the output block is resident across the si axis.
    @pl.when(si == 0)
    def _():
        ce_ref[...] = jnp.zeros_like(ce_ref)
        tr_ref[...] = jnp.zeros_like(tr_ref)

    a = logits_ref[0].astype(jnp.float32)   # [ts, V] anchor logits   (b = 3t)
    p = logits_ref[1].astype(jnp.float32)   # [ts, V] positive logits (b = 3t+1)
    n = logits_ref[2].astype(jnp.float32)   # [ts, V] negative logits (b = 3t+2)
    ts = a.shape[0]

    valid = None
    if needs_mask:
        # Remainder tile: rows past seq_len hold padding garbage; zero them
        # before any exp/sqrt so NaN/Inf garbage cannot leak into the sums.
        row = jax.lax.broadcasted_iota(jnp.int32, (ts, 1), 0)
        valid = (si * ts + row) < seq_len                       # [ts, 1] bool
        a = jnp.where(valid, a, 0.0)
        p = jnp.where(valid, p, 0.0)
        n = jnp.where(valid, n, 0.0)

    col = jax.lax.broadcasted_iota(jnp.int32, a.shape, 1)        # [ts, V]

    # ----- cross-entropy partial sum over anchor + negative rows -----
    # TODO(synk): ignore_index=-100 / label_smoothing of nn.CrossEntropyLoss
    # are not handled (defaults assumed, as in the PyTorch module).
    def _ce_sum(x, lab):                                         # lab [ts, 1]
        m = jnp.max(x, axis=-1, keepdims=True)                   # [ts, 1]
        lse = m + jnp.log(jnp.sum(jnp.exp(x - m), axis=-1, keepdims=True))
        picked = jnp.sum(jnp.where(col == lab, x, 0.0),
                         axis=-1, keepdims=True)                 # [ts, 1]
        nll = lse - picked
        if needs_mask:
            nll = jnp.where(valid, nll, 0.0)
        return jnp.sum(nll)

    ce = _ce_sum(a, labels_ref[0]) + _ce_sum(n, labels_ref[2])

    # ----- triplet-margin partial sum -----
    d_ap = jnp.sqrt(jnp.sum((a - p + EPS) ** 2, axis=-1, keepdims=True))
    d_an = jnp.sqrt(jnp.sum((a - n + EPS) ** 2, axis=-1, keepdims=True))
    hinge = jnp.maximum(d_ap - d_an + MARGIN, 0.0)
    if needs_mask:
        hinge = jnp.where(valid, hinge, 0.0)
    tr = jnp.sum(hinge)

    # Accumulate into the resident output blocks (writeback happens once per
    # triplet, when the output block index changes).
    ce_ref[...] = ce_ref[...] + jnp.reshape(ce, (1, 1, 1))
    tr_ref[...] = tr_ref[...] + jnp.reshape(tr, (1, 1, 1))


def cross_entropy_and_triplet_loss(logits, labels, caption_loss_weight,
                                   triplet_loss_weight, max_seq_tile=None):
    B, S, V = logits.shape
    assert B % 3 == 0, "batch must hold whole (anchor, positive, negative) triplets"
    num_t = B // 3

    vmem_limit, work_budget = _vmem_budgets()
    ts = _choose_seq_tile(S, V, jnp.dtype(logits.dtype).itemsize,
                          work_budget, max_seq_tile)
    num_s = pl.cdiv(S, ts)
    needs_mask = (S % ts) != 0

    # TODO(synk): when num_t == 1 the grid has no "parallel" axis left to
    # shard across the two v7x TensorCores (the si axis must stay "arbitrary"
    # for the in-kernel accumulation); a per-(t, si) partial-sum variant would
    # be needed to feed both cores in that corner case.

    labels3 = labels.astype(jnp.int32).reshape(B, S, 1)
    kernel = functools.partial(_fused_loss_kernel, seq_len=S,
                               needs_mask=needs_mask)

    out_spec = pl.BlockSpec((1, 1, 1), lambda t, si: (t, 0, 0))

    ce_part, tr_part = pl.pallas_call(
        kernel,
        out_shape=(
            jax.ShapeDtypeStruct((num_t, 1, 1), jnp.float32),
            jax.ShapeDtypeStruct((num_t, 1, 1), jnp.float32),
        ),
        grid_spec=pltpu.PrefetchScalarGridSpec(
            num_scalar_prefetch=0,
            grid=(num_t, num_s),
            in_specs=[
                # Single merged block holding anchor/positive/negative logits.
                pl.BlockSpec((3, ts, V), lambda t, si: (t, si, 0)),
                # Single merged block holding the three label rows.
                pl.BlockSpec((3, ts, 1), lambda t, si: (t, si, 0)),
            ],
            out_specs=[out_spec, out_spec],
        ),
        compiler_params=pltpu.CompilerParams(
            dimension_semantics=("parallel", "arbitrary"),
            vmem_limit_bytes=vmem_limit),
    )(logits, labels3)

    n_ce_rows = 2 * num_t * S      # rows with batch index b % 3 != 1
    n_tr_rows = num_t * S          # one distance per (triplet, token)

    caption_loss = (jnp.sum(ce_part) / np.float32(n_ce_rows)) * caption_loss_weight
    triplet_loss = (jnp.sum(tr_part) / np.float32(n_tr_rows)) * triplet_loss_weight
    return caption_loss, triplet_loss


# ----------------------------------------------------------------------------
# Pure-JAX reference (for correctness check only).
# ----------------------------------------------------------------------------
def _reference(logits, labels, clw, tlw):
    logits = logits.astype(jnp.float32)
    B, S, V = logits.shape
    keep_idx = np.array([b for b in range(B) if b % 3 != 1], dtype=np.int32)
    x = logits[keep_idx]
    y = labels[keep_idx].astype(jnp.int32)
    logp = jax.nn.log_softmax(x, axis=-1)
    nll = -jnp.take_along_axis(logp, y[..., None], axis=-1)[..., 0]
    caption = jnp.mean(nll) * clw

    a = logits[np.arange(0, B, 3)]
    p = logits[np.arange(1, B, 3)]
    n = logits[np.arange(2, B, 3)]
    d_ap = jnp.sqrt(jnp.sum((a - p + EPS) ** 2, axis=-1))
    d_an = jnp.sqrt(jnp.sum((a - n + EPS) ** 2, axis=-1))
    trip = jnp.mean(jnp.maximum(d_ap - d_an + MARGIN, 0.0)) * tlw
    return caption, trip


if __name__ == "__main__":
    # Deterministic "module parameters" (constructor args of the loss module).
    caption_loss_weight = 0.5
    triplet_loss_weight = 2.0

    # ---- test 1: f32 logits, tile == full sequence ----
    B, S, V = 6, 8, 128   # batch (multiple of 3), sequence, vocab
    key = jax.random.PRNGKey(0)
    k_logits, k_labels, k_logits2, k_labels2 = jax.random.split(key, 4)
    logits = jax.random.normal(k_logits, (B, S, V), dtype=jnp.float32)
    labels = jax.random.randint(k_labels, (B, S), 0, V, dtype=jnp.int32)

    caption_loss, triplet_loss = jax.block_until_ready(
        cross_entropy_and_triplet_loss(logits, labels,
                                       caption_loss_weight,
                                       triplet_loss_weight))
    ref_cap, ref_trip = _reference(logits, labels,
                                   caption_loss_weight, triplet_loss_weight)
    np.testing.assert_allclose(np.asarray(caption_loss), np.asarray(ref_cap),
                               rtol=1e-5, atol=1e-5)
    np.testing.assert_allclose(np.asarray(triplet_loss), np.asarray(ref_trip),
                               rtol=1e-5, atol=1e-5)

    # ---- test 2: bf16 logits, forced small tile -> multi-step accumulation
    #      with a masked remainder tile (S=24, ts=16) ----
    B2, S2, V2 = 3, 24, 256
    logits2 = jax.random.normal(k_logits2, (B2, S2, V2),
                                dtype=jnp.float32).astype(jnp.bfloat16)
    labels2 = jax.random.randint(k_labels2, (B2, S2), 0, V2, dtype=jnp.int32)

    cap2, trip2 = jax.block_until_ready(
        cross_entropy_and_triplet_loss(logits2, labels2,
                                       caption_loss_weight,
                                       triplet_loss_weight,
                                       max_seq_tile=16))
    ref_cap2, ref_trip2 = _reference(logits2, labels2,
                                     caption_loss_weight, triplet_loss_weight)
    np.testing.assert_allclose(np.asarray(cap2), np.asarray(ref_cap2),
                               rtol=1e-4, atol=1e-4)
    np.testing.assert_allclose(np.asarray(trip2), np.asarray(ref_trip2),
                               rtol=1e-4, atol=1e-4)

    print("KERNEL_OK")
</pallas_src>

<mosaic_0001>
module attributes {stable_mosaic.version = 11 : i64} {
  func.func @_fused_loss_kernel(%arg0: i32, %arg1: i32, %arg2: memref<3x8x128xf32, #tpu.memory_space<vmem>>, %arg3: memref<3x8x1xi32, #tpu.memory_space<vmem>>, %arg4: memref<1x1x1xf32, #tpu.memory_space<vmem>>, %arg5: memref<1x1x1xf32, #tpu.memory_space<vmem>>) attributes {dimension_semantics = [#tpu.dimension_semantics<parallel>, #tpu.dimension_semantics<arbitrary>], iteration_bounds = array<i64: 2, 1>, scalar_prefetch = 0 : i64, scratch_operands = 0 : i64, tpu.core_type = #tpu.core_type<tc>, window_params = [{transform_indices = @transform_0, window_bounds = array<i64: 3, 8, 128>}, {transform_indices = @transform_1, window_bounds = array<i64: 3, 8, 1>}, {transform_indices = @transform_2, window_bounds = array<i64: 1, 1, 1>}, {transform_indices = @transform_3, window_bounds = array<i64: 1, 1, 1>}]} {
    %c0_i32 = arith.constant 0 : i32
    %0 = arith.cmpi eq, %arg1, %c0_i32 : i32
    %1 = arith.extui %0 : i1 to i32
    %c0_i32_0 = arith.constant 0 : i32
    %2 = arith.cmpi ne, %1, %c0_i32_0 : i32
    scf.if %2 {
      %cst_41 = arith.constant 0.000000e+00 : f32
      %86 = vector.broadcast %cst_41 : f32 to vector<1x1x1xf32>
      %c0_42 = arith.constant 0 : index
      %c0_43 = arith.constant 0 : index
      %c0_44 = arith.constant 0 : index
      %87 = vector.load %arg4[%c0_42, %c0_43, %c0_44] : memref<1x1x1xf32, #tpu.memory_space<vmem>>, vector<1x1x1xf32>
      tpu.vector_store %arg4[%c0_42, %c0_43, %c0_44], %86 {strides = array<i32>} : memref<1x1x1xf32, #tpu.memory_space<vmem>>, vector<1x1x1xf32>,
      %cst_45 = arith.constant 0.000000e+00 : f32
      %88 = vector.broadcast %cst_45 : f32 to vector<1x1x1xf32>
      %c0_46 = arith.constant 0 : index
      %c0_47 = arith.constant 0 : index
      %c0_48 = arith.constant 0 : index
      %89 = vector.load %arg5[%c0_46, %c0_47, %c0_48] : memref<1x1x1xf32, #tpu.memory_space<vmem>>, vector<1x1x1xf32>
      tpu.vector_store %arg5[%c0_46, %c0_47, %c0_48], %88 {strides = array<i32>} : memref<1x1x1xf32, #tpu.memory_space<vmem>>, vector<1x1x1xf32>,
    } else {
    }
    %c0 = arith.constant 0 : index
    %c0_1 = arith.constant 0 : index
    %c0_2 = arith.constant 0 : index
    %3 = vector.load %arg2[%c0, %c0_1, %c0_2] : memref<3x8x128xf32, #tpu.memory_space<vmem>>, vector<1x8x128xf32>
    %4 = vector.shape_cast %3 : vector<1x8x128xf32> to vector<8x128xf32>
    %c1 = arith.constant 1 : index
    %c0_3 = arith.constant 0 : index
    %c0_4 = arith.constant 0 : index
    %5 = vector.load %arg2[%c1, %c0_3, %c0_4] : memref<3x8x128xf32, #tpu.memory_space<vmem>>, vector<1x8x128xf32>
    %6 = vector.shape_cast %5 : vector<1x8x128xf32> to vector<8x128xf32>
    %c2 = arith.constant 2 : index
    %c0_5 = arith.constant 0 : index
    %c0_6 = arith.constant 0 : index
    %7 = vector.load %arg2[%c2, %c0_5, %c0_6] : memref<3x8x128xf32, #tpu.memory_space<vmem>>, vector<1x8x128xf32>
    %8 = vector.shape_cast %7 : vector<1x8x128xf32> to vector<8x128xf32>
    %9 = tpu.iota {dimensions = array<i32: 1>} : vector<8x128xi32>
    %c0_7 = arith.constant 0 : index
    %c0_8 = arith.constant 0 : index
    %c0_9 = arith.constant 0 : index
    %10 = vector.load %arg3[%c0_7, %c0_8, %c0_9] : memref<3x8x1xi32, #tpu.memory_space<vmem>>, vector<1x8x1xi32>
    %11 = vector.shape_cast %10 : vector<1x8x1xi32> to vector<8x1xi32>
    %cst = arith.constant dense<0xFF800000> : vector<8xf32>
    %12 = vector.multi_reduction <maximumf>, %4, %cst [1] : vector<8x128xf32> to vector<8xf32>
    %13 = vector.shape_cast %12 : vector<8xf32> to vector<8x1xf32>
    %14 = vector.broadcast %13 : vector<8x1xf32> to vector<8x128xf32>
    %15 = arith.subf %4, %14 : vector<8x128xf32>
    %16 = math.exp %15 : vector<8x128xf32>
    %cst_10 = arith.constant dense<0.000000e+00> : vector<8xf32>
    %17 = vector.multi_reduction <add>, %16, %cst_10 [1] : vector<8x128xf32> to vector<8xf32>
    %18 = vector.shape_cast %17 : vector<8xf32> to vector<8x1xf32>
    %19 = math.log %18 : vector<8x1xf32>
    %20 = arith.addf %13, %19 : vector<8x1xf32>
    %21 = vector.broadcast %11 : vector<8x1xi32> to vector<8x128xi32>
    %22 = arith.cmpi eq, %9, %21 : vector<8x128xi32>
    %cst_11 = arith.constant 0.000000e+00 : f32
    %23 = vector.broadcast %cst_11 : f32 to vector<8x128xf32>
    %24 = arith.select %22, %4, %23 : vector<8x128xi1>, vector<8x128xf32>
    %cst_12 = arith.constant dense<0.000000e+00> : vector<8xf32>
    %25 = vector.multi_reduction <add>, %24, %cst_12 [1] : vector<8x128xf32> to vector<8xf32>
    %26 = vector.shape_cast %25 : vector<8xf32> to vector<8x1xf32>
    %27 = arith.subf %20, %26 : vector<8x1xf32>
    %28 = vector.shape_cast %27 : vector<8x1xf32> to vector<1x8x1xf32>
    %cst_13 = arith.constant dense<0.000000e+00> : vector<1xf32>
    %29 = vector.multi_reduction <add>, %28, %cst_13 [1, 2] : vector<1x8x1xf32> to vector<1xf32>
    %30 = vector.shape_cast %29 : vector<1xf32> to vector<1x1x1xf32>
    %31 = vector.extract %30[0, 0, 0] : f32 from vector<1x1x1xf32>
    %c2_14 = arith.constant 2 : index
    %c0_15 = arith.constant 0 : index
    %c0_16 = arith.constant 0 : index
    %32 = vector.load %arg3[%c2_14, %c0_15, %c0_16] : memref<3x8x1xi32, #tpu.memory_space<vmem>>, vector<1x8x1xi32>
    %33 = vector.shape_cast %32 : vector<1x8x1xi32> to vector<8x1xi32>
    %cst_17 = arith.constant dense<0xFF800000> : vector<8xf32>
    %34 = vector.multi_reduction <maximumf>, %8, %cst_17 [1] : vector<8x128xf32> to vector<8xf32>
    %35 = vector.shape_cast %34 : vector<8xf32> to vector<8x1xf32>
    %36 = vector.broadcast %35 : vector<8x1xf32> to vector<8x128xf32>
    %37 = arith.subf %8, %36 : vector<8x128xf32>
    %38 = math.exp %37 : vector<8x128xf32>
    %cst_18 = arith.constant dense<0.000000e+00> : vector<8xf32>
    %39 = vector.multi_reduction <add>, %38, %cst_18 [1] : vector<8x128xf32> to vector<8xf32>
    %40 = vector.shape_cast %39 : vector<8xf32> to vector<8x1xf32>
    %41 = math.log %40 : vector<8x1xf32>
    %42 = arith.addf %35, %41 : vector<8x1xf32>
    %43 = vector.broadcast %33 : vector<8x1xi32> to vector<8x128xi32>
    %44 = arith.cmpi eq, %9, %43 : vector<8x128xi32>
    %cst_19 = arith.constant 0.000000e+00 : f32
    %45 = vector.broadcast %cst_19 : f32 to vector<8x128xf32>
    %46 = arith.select %44, %8, %45 : vector<8x128xi1>, vector<8x128xf32>
    %cst_20 = arith.constant dense<0.000000e+00> : vector<8xf32>
    %47 = vector.multi_reduction <add>, %46, %cst_20 [1] : vector<8x128xf32> to vector<8xf32>
    %48 = vector.shape_cast %47 : vector<8xf32> to vector<8x1xf32>
    %49 = arith.subf %42, %48 : vector<8x1xf32>
    %50 = vector.shape_cast %49 : vector<8x1xf32> to vector<1x8x1xf32>
    %cst_21 = arith.constant dense<0.000000e+00> : vector<1xf32>
    %51 = vector.multi_reduction <add>, %50, %cst_21 [1, 2] : vector<1x8x1xf32> to vector<1xf32>
    %52 = vector.shape_cast %51 : vector<1xf32> to vector<1x1x1xf32>
    %53 = vector.extract %52[0, 0, 0] : f32 from vector<1x1x1xf32>
    %54 = arith.addf %31, %53 : f32
    %55 = arith.subf %4, %6 : vector<8x128xf32>
    %cst_22 = arith.constant 9.99999997E-7 : f32
    %56 = vector.broadcast %cst_22 : f32 to vector<8x128xf32>
    %57 = arith.addf %55, %56 : vector<8x128xf32>
    %58 = arith.mulf %57, %57 : vector<8x128xf32>
    %cst_23 = arith.constant dense<0.000000e+00> : vector<8xf32>
    %59 = vector.multi_reduction <add>, %58, %cst_23 [1] : vector<8x128xf32> to vector<8xf32>
    %60 = vector.shape_cast %59 : vector<8xf32> to vector<8x1xf32>
    %61 = math.sqrt %60 : vector<8x1xf32>
    %62 = arith.subf %4, %8 : vector<8x128xf32>
    %cst_24 = arith.constant 9.99999997E-7 : f32
    %63 = vector.broadcast %cst_24 : f32 to vector<8x128xf32>
    %64 = arith.addf %62, %63 : vector<8x128xf32>
    %65 = arith.mulf %64, %64 : vector<8x128xf32>
    %cst_25 = arith.constant dense<0.000000e+00> : vector<8xf32>
    %66 = vector.multi_reduction <add>, %65, %cst_25 [1] : vector<8x128xf32> to vector<8xf32>
    %67 = vector.shape_cast %66 : vector<8xf32> to vector<8x1xf32>
    %68 = math.sqrt %67 : vector<8x1xf32>
    %69 = arith.subf %61, %68 : vector<8x1xf32>
    %cst_26 = arith.constant 1.000000e+00 : f32
    %70 = vector.broadcast %cst_26 : f32 to vector<8x1xf32>
    %71 = arith.addf %69, %70 : vector<8x1xf32>
    %cst_27 = arith.constant 0.000000e+00 : f32
    %72 = vector.broadcast %cst_27 : f32 to vector<8x1xf32>
    %73 = arith.maximumf %71, %72 : vector<8x1xf32>
    %74 = vector.shape_cast %73 : vector<8x1xf32> to vector<1x8x1xf32>
    %cst_28 = arith.constant dense<0.000000e+00> : vector<1xf32>
    %75 = vector.multi_reduction <add>, %74, %cst_28 [1, 2] : vector<1x8x1xf32> to vector<1xf32>
    %76 = vector.shape_cast %75 : vector<1xf32> to vector<1x1x1xf32>
    %77 = vector.extract %76[0, 0, 0] : f32 from vector<1x1x1xf32>
    %c0_29 = arith.constant 0 : index
    %c0_30 = arith.constant 0 : index
    %c0_31 = arith.constant 0 : index
    %78 = vector.load %arg4[%c0_29, %c0_30, %c0_31] : memref<1x1x1xf32, #tpu.memory_space<vmem>>, vector<1x1x1xf32>
    %79 = vector.broadcast %54 : f32 to vector<1x1x1xf32>
    %80 = arith.addf %78, %79 : vector<1x1x1xf32>
    %c0_32 = arith.constant 0 : index
    %c0_33 = arith.constant 0 : index
    %c0_34 = arith.constant 0 : index
    %81 = vector.load %arg4[%c0_32, %c0_33, %c0_34] : memref<1x1x1xf32, #tpu.memory_space<vmem>>, vector<1x1x1xf32>
    tpu.vector_store %arg4[%c0_32, %c0_33, %c0_34], %80 {strides = array<i32>} : memref<1x1x1xf32, #tpu.memory_space<vmem>>, vector<1x1x1xf32>,
    %c0_35 = arith.constant 0 : index
    %c0_36 = arith.constant 0 : index
    %c0_37 = arith.constant 0 : index
    %82 = vector.load %arg5[%c0_35, %c0_36, %c0_37] : memref<1x1x1xf32, #tpu.memory_space<vmem>>, vector<1x1x1xf32>
    %83 = vector.broadcast %77 : f32 to vector<1x1x1xf32>
    %84 = arith.addf %82, %83 : vector<1x1x1xf32>
    %c0_38 = arith.constant 0 : index
    %c0_39 = arith.constant 0 : index
    %c0_40 = arith.constant 0 : index
    %85 = vector.load %arg5[%c0_38, %c0_39, %c0_40] : memref<1x1x1xf32, #tpu.memory_space<vmem>>, vector<1x1x1xf32>
    tpu.vector_store %arg5[%c0_38, %c0_39, %c0_40], %84 {strides = array<i32>} : memref<1x1x1xf32, #tpu.memory_space<vmem>>, vector<1x1x1xf32>,
    return
  }
  func.func @transform_0(%arg0: i32, %arg1: i32) -> (i32, i32, i32) {
    %c0_i32 = arith.constant 0 : i32
    %c0_i32_0 = arith.constant 0 : i32
    return %arg0, %arg1, %c0_i32 : i32, i32, i32
  }
  func.func @transform_1(%arg0: i32, %arg1: i32) -> (i32, i32, i32) {
    %c0_i32 = arith.constant 0 : i32
    %c0_i32_0 = arith.constant 0 : i32
    return %arg0, %arg1, %c0_i32 : i32, i32, i32
  }
  func.func @transform_2(%arg0: i32, %arg1: i32) -> (i32, i32, i32) {
    %c0_i32 = arith.constant 0 : i32
    %c0_i32_0 = arith.constant 0 : i32
    %c0_i32_1 = arith.constant 0 : i32
    return %arg0, %c0_i32, %c0_i32_0 : i32, i32, i32
  }
  func.func @transform_3(%arg0: i32, %arg1: i32) -> (i32, i32, i32) {
    %c0_i32 = arith.constant 0 : i32
    %c0_i32_0 = arith.constant 0 : i32
    %c0_i32_1 = arith.constant 0 : i32
    return %arg0, %c0_i32, %c0_i32_0 : i32, i32, i32
  }
}

</mosaic_0001>

<llo_original>
// kernel: tpu_custom_call.1
$region0: #{tpu_custom_call.1}
  #allocation0 [shape = 'u32[]', space=smem, size = 0x4, offset = 0x4, fixed_abs, tag = 'smem constant byte address 0x4 - core index']
  #allocation1 [shape = 'u32[144,128]{1,0:T(1,128)}', space=vmem, size = 0x12000, scoped, tag = 'internal scratch']
  %s0 = inlined_call_operand.vmem [shape: f32[6,8,128], index: 0, kind: input, shape index: {}]
  %s1 = inlined_call_operand.vmem [shape: s32[6,8,1], index: 1, kind: input, shape index: {}]
  %s2 = inlined_call_operand.vmem [shape: f32[2,1,1], index: 2, kind: output, shape index: {0}]
  %s3 = inlined_call_operand.vmem [shape: f32[2,1,1], index: 3, kind: output, shape index: {1}]
  %4 = xla_tuple %s2, %s3
  %s5 = sld [smem:[#allocation0]]
  $region53: #{tpu_custom_call.1} parent=0
    _
  %s7 = ssub.s32 1, %s5
  %s8 = scalar_select 0, %s7, %s5
  loop: start=0, step=1, limit=4
  $region2: #{tpu_custom_call.1} parent=0 // loop_pre_header
    _
  $region3: #{tpu_custom_call.1} parent=0 // loop_header
    %s10 = sphi 0, %s14
    %p11 = scmp.ge.s32.totalorder %s10, 4
    %s17 = sphi 0, %s29
    %s18 = sphi 0, %s25
    %s19 = sphi 0, %s17
    %s20 = sphi 0, %s18
    %s21 = sphi 0, %s19
    %s22 = sphi 0, %s20
    %s34 = sphi 0, %s36
    %s37 = sphi 0, %s34
    %s38 = sphi 0, %s37
    %s54 = sphi 0, %s38
    %s62 = sphi 0, %s64
    %s65 = sphi 0, %s62
    %s66 = sphi 0, %s65
    %s82 = sphi 0, %s66
    %s88 = sphi 0, %s90
    %s91 = sphi 0, %s88
    %s92 = sphi 0, %s91
    %s108 = sphi 0, %s92
    %s114 = sphi 0, %s116
    %s117 = sphi 0, %s114
    %s118 = sphi 0, %s117
    %s134 = sphi 0, %s118
  $region4: #{tpu_custom_call.1} parent=0 // loop_header_branch
    %13 = sbr.rel (%p11) target = $region8
  $region5: #{tpu_custom_call.1} parent=0 // loop_body
    %s15 = ssub.s32 %s10, 1
    %s16 = ssub.s32 %s10, 2
    %s23 = sadd.s32 1, %s18
    %p24 = scmp.ge.s32.totalorder %s23, 1
    %s25 = scalar_select %p24, 0, %s23
    %s26 = sadd.s32 1, %s17
    %s27 = scalar_select %p24, %s26, %s17
    %p28 = scmp.ge.s32.totalorder %s27, 2
    %s29 = scalar_select %p28, 0, %s27
    %s30 = ssub.s32 %s17, %s29
    %s31 = ssub.s32 %s18, %s25
    %s32 = sor.u32 %s30, %s31
    %p33 = scmp.eq.s32.totalorder %s32, 0
    %s35 = sadd.s32 %s34, 1
    %s36 = scalar_select %p33, %s34, %s35
    %p39 = pneg %p33
    %p40 = scmp.eq.s32.totalorder %s10, 1
    %p41 = por %p39, %p40
    %p42 = scmp.ne.s32.totalorder %s34, %s37
    %p43 = scmp.eq.s32.totalorder %s10, 0
    %p44 = por %p42, %p43
    %p45 = scmp.ne.s32.totalorder %s34, %s37
    %p46 = scmp.eq.s32.totalorder %s15, 1
    %p47 = por %p45, %p46
    %p48 = scmp.ne.s32.totalorder %s37, %s38
    %p49 = scmp.eq.s32.totalorder %s15, 0
    %p50 = por %p48, %p49
    %p51 = scmp.ne.s32.totalorder %s37, %s38
    %p52 = scmp.eq.s32.totalorder %s16, 1
    %p53 = por %p51, %p52
    %p55 = scmp.ne.s32.totalorder %s38, %s54
    %p56 = scmp.eq.s32.totalorder %s16, 0
    %p57 = por %p55, %p56
    %s58 = ssub.s32 %s17, %s29
    %s59 = ssub.s32 %s18, %s25
    %s60 = sor.u32 %s58, %s59
    %p61 = scmp.eq.s32.totalorder %s60, 0
    %s63 = sadd.s32 %s62, 1
    %s64 = scalar_select %p61, %s62, %s63
    %p67 = pneg %p61
    %p68 = scmp.eq.s32.totalorder %s10, 1
    %p69 = por %p67, %p68
    %p70 = scmp.ne.s32.totalorder %s62, %s65
    %p71 = scmp.eq.s32.totalorder %s10, 0
    %p72 = por %p70, %p71
    %p73 = scmp.ne.s32.totalorder %s62, %s65
    %p74 = scmp.eq.s32.totalorder %s15, 1
    %p75 = por %p73, %p74
    %p76 = scmp.ne.s32.totalorder %s65, %s66
    %p77 = scmp.eq.s32.totalorder %s15, 0
    %p78 = por %p76, %p77
    %p79 = scmp.ne.s32.totalorder %s65, %s66
    %p80 = scmp.eq.s32.totalorder %s16, 1
    %p81 = por %p79, %p80
    %p83 = scmp.ne.s32.totalorder %s66, %s82
    %p84 = scmp.eq.s32.totalorder %s16, 0
    %p85 = por %p83, %p84
    %s86 = ssub.s32 %s17, %s29
    %p87 = scmp.eq.s32.totalorder %s86, 0
    %s89 = sadd.s32 %s88, 1
    %s90 = scalar_select %p87, %s88, %s89
    %p93 = pneg %p87
    %p94 = scmp.eq.s32.totalorder %s10, 1
    %p95 = por %p93, %p94
    %p96 = scmp.ne.s32.totalorder %s88, %s91
    %p97 = scmp.eq.s32.totalorder %s10, 0
    %p98 = por %p96, %p97
    %p99 = scmp.ne.s32.totalorder %s88, %s91
    %p100 = scmp.eq.s32.totalorder %s15, 1
    %p101 = por %p99, %p100
    %p102 = scmp.ne.s32.totalorder %s91, %s92
    %p103 = scmp.eq.s32.totalorder %s15, 0
    %p104 = por %p102, %p103
    %p105 = scmp.ne.s32.totalorder %s91, %s92
    %p106 = scmp.eq.s32.totalorder %s16, 1
    %p107 = por %p105, %p106
    %p109 = scmp.ne.s32.totalorder %s92, %s108
    %p110 = scmp.eq.s32.totalorder %s16, 0
    %p111 = por %p109, %p110
    %s112 = ssub.s32 %s17, %s29
    %p113 = scmp.eq.s32.totalorder %s112, 0
    %s115 = sadd.s32 %s114, 1
    %s116 = scalar_select %p113, %s114, %s115
    %p119 = pneg %p113
    %p120 = scmp.eq.s32.totalorder %s10, 1
    %p121 = por %p119, %p120
    %p122 = scmp.ne.s32.totalorder %s114, %s117
    %p123 = scmp.eq.s32.totalorder %s10, 0
    %p124 = por %p122, %p123
    %p125 = scmp.ne.s32.totalorder %s114, %s117
    %p126 = scmp.eq.s32.totalorder %s15, 1
    %p127 = por %p125, %p126
    %p128 = scmp.ne.s32.totalorder %s117, %s118
    %p129 = scmp.eq.s32.totalorder %s15, 0
    %p130 = por %p128, %p129
    %p131 = scmp.ne.s32.totalorder %s117, %s118
    %p132 = scmp.eq.s32.totalorder %s16, 1
    %p133 = por %p131, %p132
    %p135 = scmp.ne.s32.totalorder %s118, %s134
    %p136 = scmp.eq.s32.totalorder %s16, 0
    %p137 = por %p135, %p136
    %p138 = scmp.le.s32.totalorder 1, %s10
    %p139 = scmp.lt.s32.totalorder %s10, 3
    %p140 = pnand %p138, %p139
    %p141 = pneg %p140
    // Predicated region
    $region9: #{tpu_custom_call.1} parent=5 // pred_check
      _
    $region10: #{tpu_custom_call.1} parent=5 // pred_check_branch
      %143 = sbr.rel (%p140) target = $region12
    $region11: #{tpu_custom_call.1} parent=5 // pred_region
      %s144 = ssub.s32 %s10, 1
    $region12: #{tpu_custom_call.1} parent=5 // pred_fallthru
      _
    %p145 = scmp.lt.s32.totalorder %s10, 2
    // Predicated region
    $region13: #{tpu_custom_call.1} parent=5 // pred_check
      %p146 = pneg %p145
    $region14: #{tpu_custom_call.1} parent=5 // pred_check_branch
      %148 = sbr.rel (%p146) target = $region16
    $region15: #{tpu_custom_call.1} parent=5 // pred_region
      // Predicated region
      $region17: #{tpu_custom_call.1} parent=15 // pred_check
        %p149 = pneg %p44
      $region18: #{tpu_custom_call.1} parent=15 // pred_check_branch
        %151 = sbr.rel (%p149) target = $region20
      $region19: #{tpu_custom_call.1} parent=15 // pred_region
        %s152 = smul.u32 3, %s17
        %p153 = scmp.lt.s32.totalorder %s152, 5
        %s154 = scalar_select %p153, %s152, 5
        %p155 = scmp.lt.s32.totalorder %s18, 0
        %s156 = scalar_select %p155, %s18, 0
        %s157 = sadd.s32 %s156, %s154
        %s158 = smul.addr %s157, 8
        %s159 = scalar_lea.vmem %s0, %s158
        %s160 = smul.u32 3, %s17
      $region20: #{tpu_custom_call.1} parent=15 // pred_fallthru
        _
      // Predicated region
      $region21: #{tpu_custom_call.1} parent=15 // pred_check
        %p161 = pneg %p72
      $region22: #{tpu_custom_call.1} parent=15 // pred_check_branch
        %163 = sbr.rel (%p161) target = $region24
      $region23: #{tpu_custom_call.1} parent=15 // pred_region
        %s164 = smul.u32 3, %s17
        %p165 = scmp.lt.s32.totalorder %s164, 5
        %s166 = scalar_select %p165, %s164, 5
        %p167 = scmp.lt.s32.totalorder %s18, 0
        %s168 = scalar_select %p167, %s18, 0
        %s169 = sadd.s32 %s168, %s166
        %s170 = smul.addr %s169, 8
        %s171 = scalar_lea.vmem %s1, %s170
        %s172 = smul.u32 3, %s17
      $region24: #{tpu_custom_call.1} parent=15 // pred_fallthru
        _
    $region16: #{tpu_custom_call.1} parent=5 // pred_fallthru
      _
    %p173 = scmp.le.s32.totalorder 1, %s10
    %p174 = scmp.lt.s32.totalorder %s10, 3
    %p175 = pnand %p173, %p174
    %p176 = pneg %p175
    // Predicated region
    $region25: #{tpu_custom_call.1} parent=5 // pred_check
      _
    $region26: #{tpu_custom_call.1} parent=5 // pred_check_branch
      %178 = sbr.rel (%p175) target = $region28
    $region27: #{tpu_custom_call.1} parent=5 // pred_region
      %s179 = ssub.s32 %s10, 1
      %s180 = smul.u32 3, %s19
      %p181 = scmp.lt.s32.totalorder %s180, 5
      %s182 = scalar_select %p181, %s180, 5
      %p183 = scmp.lt.s32.totalorder %s20, 0
      %s184 = scalar_select %p183, %s20, 0
      %s185 = sadd.s32 %s184, %s182
      %s186 = smul.addr %s185, 8
      %s187 = scalar_lea.vmem %s0, %s186
      %p188 = pneg %p50
      %p189 = pneg %p47
      %s190 = smul.u32 3, %s19
      %p191 = scmp.lt.s32.totalorder %s190, 5
      %s192 = scalar_select %p191, %s190, 5
      %p193 = scmp.lt.s32.totalorder %s20, 0
      %s194 = scalar_select %p193, %s20, 0
      %s195 = sadd.s32 %s194, %s192
      %s196 = smul.addr %s195, 8
      %s197 = scalar_lea.vmem %s1, %s196
      %p198 = pneg %p78
      %p199 = pneg %p75
      %p200 = pneg %p104
      %p201 = pneg %p101
      %p202 = scmp.lt.s32.totalorder %s19, 1
      %s203 = scalar_select %p202, %s19, 1
      %s204 = scalar_lea.vmem %s2, %s203
      %p205 = pneg %p130
      %p206 = pneg %p127
      %p207 = scmp.lt.s32.totalorder %s19, 1
      %s208 = scalar_select %p207, %s19, 1
      %s209 = scalar_lea.vmem %s3, %s208
      %s210 = smul.u32 3, %s19
      %p211 = scmp.lt.s32.totalorder %s210, 5
      %s212 = scalar_select %p211, %s210, 5
      %p213 = scmp.lt.s32.totalorder %s20, 0
      %s214 = scalar_select %p213, %s20, 0
      %s215 = sadd.s32 %s214, %s212
      %s216 = smul.addr %s215, 8
      %s217 = scalar_lea.vmem %s0, %s216
      %s218 = smul.u32 3, %s19
      %s219 = smul.u32 3, %s19
      %p220 = scmp.lt.s32.totalorder %s219, 5
      %s221 = scalar_select %p220, %s219, 5
      %p222 = scmp.lt.s32.totalorder %s20, 0
      %s223 = scalar_select %p222, %s20, 0
      %s224 = sadd.s32 %s223, %s221
      %s225 = smul.addr %s224, 8
      %s226 = scalar_lea.vmem %s1, %s225
      %s227 = smul.u32 3, %s19
      %p228 = scmp.lt.s32.totalorder %s19, 1
      %s229 = scalar_select %p228, %s19, 1
      %s230 = scalar_lea.vmem %s2, %s229
      %p231 = scmp.lt.s32.totalorder %s19, 1
      %s232 = scalar_select %p231, %s19, 1
      %s233 = scalar_lea.vmem %s3, %s232
      %p234 = scmp.eq.s32.totalorder %s20, 0
      // Predicated region
      $region29: #{tpu_custom_call.1} parent=27 // pred_check
        %p235 = pneg %p234
      $region30: #{tpu_custom_call.1} parent=27 // pred_check_branch
        %237 = sbr.rel (%p235) target = $region32
      $region31: #{tpu_custom_call.1} parent=27 // pred_region
        %vm238 = vcmask 0
        %239 = vst.msk [vmem:[%s230] sm:$0x1] %vm238, 0.0
        %240 = vst.msk [vmem:[%s233] sm:$0x1] %vm238, 0.0
      $region32: #{tpu_custom_call.1} parent=27 // pred_fallthru
        _
      %v241 = vld [vmem:[%s217] sm:$0xff]
      %s242 = scalar_lea.vmem %s217, 8
      %v243 = vld [vmem:[%s242] sm:$0xff]
      %s244 = scalar_lea.vmem %s217, 16
      %v245 = vld [vmem:[%s244] sm:$0xff]
      %v246 = vlaneseq
      %v247 = vand.u32 %v246, 127
      %v248 = vld [vmem:[%s226] sm:$0xff]
      %249 = vmax.xlane.f32.xlu0 %v241
      %v250 = vpop.xlane.xlu0 %249
      %v251 = vsub.f32 %v241, %v250
      %v252 = vmul.f32 %v251, 1.442695
      %v253 = vpow.pop %v252
      %254 = vadd.xlane.f32.xlu0 %v253
      %v255 = vpop.xlane.xlu0 %254
      %v256 = vlog2.pop %v255
      %v257 = vmul.f32 %v256, 0.6931472
      %v258 = vadd.f32 %v250, %v257
      %259 = vset.pattern.permute.xlu0 0
      %260 = vperm.xlu0 %259, %v248
      %v261 = vpop.permute.xlu0 %260
      %vm262 = vcmp.eq.s32.totalorder %v247, %v261
      %v263 = vsel %vm262, %v241, 0.0
      %264 = vadd.xlane.f32.xlu0 %v263
      %v265 = vpop.xlane.xlu0 %264
      %v266 = vsub.f32 %v258, %v265
      %vm267 = vcmask 7168
      %v268 = vsel %vm267, %v266, 0.0
      %269 = vadd.xlane.f32.xlu0 %v268
      %v270 = vpop.xlane.xlu0 %269
      %v271 = vrot.slane %v270, 4
      %v272 = vadd.f32 %v270, %v271
      %v273 = vrot.slane %v272, 2
      %v274 = vadd.f32 %v272, %v273
      %v275 = vrot.slane %v274, 1
      %v276 = vadd.f32 %v274, %v275
      %s277 = vtos %v276
      %s278 = scalar_lea.vmem %s226, 16
      %v279 = vld [vmem:[%s278] sm:$0xff]
      %280 = vmax.xlane.f32.xlu0 %v245
      %v281 = vpop.xlane.xlu0 %280
      %v282 = vsub.f32 %v245, %v281
      %v283 = vmul.f32 %v282, 1.442695
      %v284 = vpow.pop %v283
      %285 = vadd.xlane.f32.xlu0 %v284
      %v286 = vpop.xlane.xlu0 %285
      %v287 = vlog2.pop %v286
      %v288 = vmul.f32 %v287, 0.6931472
      %v289 = vadd.f32 %v281, %v288
      %290 = vset.pattern.permute.xlu0 0
      %291 = vperm.xlu0 %290, %v279
      %v292 = vpop.permute.xlu0 %291
      %vm293 = vcmp.eq.s32.totalorder %v247, %v292
      %v294 = vsel %vm293, %v245, 0.0
      %295 = vadd.xlane.f32.xlu0 %v294
      %v296 = vpop.xlane.xlu0 %295
      %v297 = vsub.f32 %v289, %v296
      %v298 = vsel %vm267, %v297, 0.0
      %299 = vadd.xlane.f32.xlu0 %v298
      %v300 = vpop.xlane.xlu0 %299
      %v301 = vrot.slane %v300, 4
      %v302 = vadd.f32 %v300, %v301
      %v303 = vrot.slane %v302, 2
      %v304 = vadd.f32 %v302, %v303
      %v305 = vrot.slane %v304, 1
      %v306 = vadd.f32 %v304, %v305
      %s307 = vtos %v306
      %s308 = sadd.f32 %s277, %s307
      %v309 = vsub.f32 %v241, %v243
      %v310 = vadd.f32 %v309, 1e-06
      %v311 = vmul.f32 %v310, %v310
      %312 = vadd.xlane.f32.xlu0 %v311
      %v313 = vpop.xlane.xlu0 %312
      %v314 = vrsqrt.pop %v313
      %v315 = vmul.f32 %v313, %v314
      %vm316 = vcmp.eq.f32.partialorder %v313, inf
      %v317 = vsel %vm316, %v313, %v315
      %vm318 = vcmp.eq.f32.partialorder %v313, 0.0
      %v319 = vand.u32 %v313, 2147483648
      %v320 = vsel %vm318, %v319, %v317
      %v321 = vsub.f32 %v241, %v245
      %v322 = vadd.f32 %v321, 1e-06
      %v323 = vmul.f32 %v322, %v322
      %324 = vadd.xlane.f32.xlu0 %v323
      %v325 = vpop.xlane.xlu0 %324
      %v326 = vrsqrt.pop %v325
      %v327 = vmul.f32 %v325, %v326
      %vm328 = vcmp.eq.f32.partialorder %v325, inf
      %v329 = vsel %vm328, %v325, %v327
      %vm330 = vcmp.eq.f32.partialorder %v325, 0.0
      %v331 = vand.u32 %v325, 2147483648
      %v332 = vsel %vm330, %v331, %v329
      %v333 = vsub.f32 %v320, %v332
      %v334 = vadd.f32 %v333, 1.0
      %v335 = vmax.f32 %v334, 0.0
      %v336 = vsel %vm267, %v335, 0.0
      %337 = vadd.xlane.f32.xlu0 %v336
      %v338 = vpop.xlane.xlu0 %337
      %v339 = vrot.slane %v338, 4
      %v340 = vadd.f32 %v338, %v339
      %v341 = vrot.slane %v340, 2
      %v342 = vadd.f32 %v340, %v341
      %v343 = vrot.slane %v342, 1
      %v344 = vadd.f32 %v342, %v343
      %s345 = vtos %v344
      %v346 = vld [vmem:[%s230] sm:$0x1]
      %v347 = vstv %s308
      %v348 = vadd.f32 %v346, %v347
      %vm349 = vcmask 0
      %350 = vst.msk [vmem:[%s230] sm:$0x1] %vm349, %v348
      %v351 = vld [vmem:[%s233] sm:$0x1]
      %v352 = vstv %s345
      %v353 = vadd.f32 %v351, %v352
      %354 = vst.msk [vmem:[%s233] sm:$0x1] %vm349, %v353
      %p355 = scmp.lt.s32.totalorder %s19, 1
      %s356 = scalar_select %p355, %s19, 1
      %s357 = scalar_lea.vmem %s2, %s356
      %p358 = scmp.lt.s32.totalorder %s19, 1
      %s359 = scalar_select %p358, %s19, 1
      %s360 = scalar_lea.vmem %s3, %s359
      // Predicated region
      $region33: #{tpu_custom_call.1} parent=27 // pred_check
        %p361 = pneg %p101
      $region34: #{tpu_custom_call.1} parent=27 // pred_check_branch
        %363 = sbr.rel (%p361) target = $region36
      $region35: #{tpu_custom_call.1} parent=27 // pred_region
        _
      $region36: #{tpu_custom_call.1} parent=27 // pred_fallthru
        _
      // Predicated region
      $region37: #{tpu_custom_call.1} parent=27 // pred_check
        %p364 = pneg %p127
      $region38: #{tpu_custom_call.1} parent=27 // pred_check_branch
        %366 = sbr.rel (%p364) target = $region40
      $region39: #{tpu_custom_call.1} parent=27 // pred_region
        _
      $region40: #{tpu_custom_call.1} parent=27 // pred_fallthru
        _
    $region28: #{tpu_custom_call.1} parent=5 // pred_fallthru
      _
    %p367 = scmp.le.s32.totalorder 2, %s10
    // Predicated region
    $region41: #{tpu_custom_call.1} parent=5 // pred_check
      %p368 = pneg %p367
    $region42: #{tpu_custom_call.1} parent=5 // pred_check_branch
      %370 = sbr.rel (%p368) target = $region44
    $region43: #{tpu_custom_call.1} parent=5 // pred_region
      %s371 = ssub.s32 %s10, 2
      // Predicated region
      $region45: #{tpu_custom_call.1} parent=43 // pred_check
        %p372 = pneg %p107
      $region46: #{tpu_custom_call.1} parent=43 // pred_check_branch
        %374 = sbr.rel (%p372) target = $region48
      $region47: #{tpu_custom_call.1} parent=43 // pred_region
        %p375 = scmp.lt.s32.totalorder %s21, 1
        %s376 = scalar_select %p375, %s21, 1
        %s377 = scalar_lea.vmem %s2, %s376
      $region48: #{tpu_custom_call.1} parent=43 // pred_fallthru
        _
      // Predicated region
      $region49: #{tpu_custom_call.1} parent=43 // pred_check
        %p378 = pneg %p133
      $region50: #{tpu_custom_call.1} parent=43 // pred_check_branch
        %380 = sbr.rel (%p378) target = $region52
      $region51: #{tpu_custom_call.1} parent=43 // pred_region
        %p381 = scmp.lt.s32.totalorder %s21, 1
        %s382 = scalar_select %p381, %s21, 1
        %s383 = scalar_lea.vmem %s3, %s382
      $region52: #{tpu_custom_call.1} parent=43 // pred_fallthru
        _
    $region44: #{tpu_custom_call.1} parent=5 // pred_fallthru
      _
  $region6: #{tpu_custom_call.1} parent=0 // loop_footer
    %s14 = sadd.s32 1, %s10
  $region7: #{tpu_custom_call.1} parent=0 // loop_footer_branch
    %9 = sbr.rel target = $region3
  $region8: #{tpu_custom_call.1} parent=0 // loop_exit
    _

</llo_original>
